<compile_context>
chip_gen: v5e
topology: v5e:2x2
jax: 0.10.0
libtpu: 0.0.40
codegen_flags: <defaults>
</compile_context>

<pallas_src>
import jax
import jax.numpy as jnp
from jax.experimental import pallas as pl
from jax.experimental.pallas import tpu as pltpu


def _self_attn_kernel(x_ref, w_ref, b_ref, v_ref, we_ref, be_ref,
                      o_ref, ai_ref):
    Bb, T, F = x_ref.shape

    # Load the x block once; keep an f32 working copy.  The merge-batch/seq
    # reshape below is layout-trivial for f32 (8,128) tiling (T=8 rows per
    # batch element == one sublane tile) and the weighted sum over T wants f32.
    x_f32 = x_ref[...].astype(jnp.float32)            # (Bb, T, F)
    x2 = x_f32.reshape(Bb * T, F)                      # (Bb*T, F)

    # ui = tanh(x @ W + b): one (Bb*T, F) @ (F, F) MXU matmul per grid step.
    # Feed the MXU in the weight dtype (bf16 streaming -> bf16 MXU inputs);
    # accumulate in f32.
    pre = (jnp.dot(x2.astype(w_ref.dtype), w_ref[...],
                   preferred_element_type=jnp.float32)
           + b_ref[...].astype(jnp.float32))           # (Bb*T, F) f32
    if x_ref.dtype == jnp.bfloat16:
        # bf16 EUP (v6e/v7x) packs 2 elems/lane -> half the tanh pushes.
        ui = jnp.tanh(pre.astype(jnp.bfloat16)).astype(jnp.float32)
    else:
        ui = jnp.tanh(pre)
    ui = ui.reshape(Bb, T, F)

    # scores = ui @ V as a VPU multiply + lane reduce (V passed as a lane-dense
    # (1, F) row; avoids a degenerate N=1 MXU push).  Result (Bb, T).
    v_row = v_ref[...].astype(jnp.float32).reshape(1, 1, F)
    s = jnp.sum(ui * v_row, axis=-1)                   # (Bb, T) f32

    # Softmax over the sequence axis (PyTorch dim=1); exact normalization
    # (the denominator is one tiny (Bb, 1) slab, so an exact divide is free).
    s = s - jnp.max(s, axis=-1, keepdims=True)
    e = jnp.exp(s)
    ai = e / jnp.sum(e, axis=-1, keepdims=True)        # (Bb, T) f32

    # o = sum_t x[b, t, :] * ai[b, t]                  -> (Bb, F) f32
    o = jnp.sum(x_f32 * ai[:, :, None], axis=1)

    # Embedding Linear: (Bb, F) @ (F, U) + be          -> (Bb, U) f32
    o_emb = (jnp.dot(o.astype(we_ref.dtype), we_ref[...],
                     preferred_element_type=jnp.float32)
             + be_ref[...].astype(jnp.float32))

    # Lane-dense stores: T and U are far below 128, so write the outputs
    # transposed (batch on the lane axis) instead of masked partial stores.
    # Both transposes are 32-bit 2-D XLU transposes; the wrapper undoes them.
    ai_ref[...] = jnp.transpose(ai).astype(ai_ref.dtype)    # (T, Bb)
    o_ref[...] = jnp.transpose(o_emb).astype(o_ref.dtype)   # (U, Bb)


def _auto_b_blk(B, T, F, itemsize, target_bytes):
    """Pick the per-step batch block.

    Tiny problems -> one grid step with everything resident (no per-step
    pipeline overhead).  Otherwise target ~target_bytes of x per step
    (default 4 MiB), rounded to a multiple of 128 so the lane-dense
    (T, b_blk)/(U, b_blk) output tiles satisfy the (8, 128) block constraint,
    while keeping >= 2 grid steps for v7x's two TensorCores.
    """
    row_bytes = T * F * itemsize
    if B * row_bytes <= 2 * target_bytes:
        return B
    blk = max(128, (target_bytes // row_bytes) // 128 * 128)
    while blk > 128 and (B + blk - 1) // blk < 2:
        blk -= 128
    return int(blk)


def self_attn_v2(x, W, b, V, We, be, *, b_blk=None, target_block_bytes=4 << 20):
    """x: (B, T, F); W: (F, F); b: (F,); V: (F, 1); We: (F, U); be: (U,).

    Pass bf16 x/W/b/V/We/be to stream in bf16 (f32 accumulation inside).
    Returns (o, ai): o in x.dtype, ai always f32 (PyTorch softmax parity).
    """
    B, T, F = x.shape
    U = We.shape[1]
    out_o_dtype = x.dtype

    if b_blk is None:
        b_blk = _auto_b_blk(B, T, F, jnp.dtype(x.dtype).itemsize,
                            target_block_bytes)
    if B > b_blk and b_blk % 128 != 0:
        raise ValueError("b_blk must be a multiple of 128 when it does not "
                         "cover the whole batch (lane-dense output tiling).")

    # Pad the batch so every grid step processes a full (b_blk, T, F) slab.
    # Padded rows just compute a uniform softmax over zero scores and are
    # sliced off afterwards (harmless; negligible at small pad fractions).
    Bp = ((B + b_blk - 1) // b_blk) * b_blk
    if Bp != B:
        x = jnp.pad(x, ((0, Bp - B), (0, 0), (0, 0)))

    b2 = b.reshape(1, F)
    v_row = V.reshape(1, F)      # (F, 1) column -> lane-dense (1, F) row
    be2 = be.reshape(1, U)

    n_steps = Bp // b_blk

    # Right-sized VMEM budget: double-buffered x stream + in-kernel f32
    # intermediates (~3 block-sized f32 values) + single-buffered weights +
    # double-buffered (tiny) outputs, with ~1.5x headroom.  Capped well under
    # v7x's 64 MiB VMEM.
    itemsize = jnp.dtype(x.dtype).itemsize
    w_itemsize = jnp.dtype(W.dtype).itemsize
    o_itemsize = jnp.dtype(out_o_dtype).itemsize
    vmem_need = (2 * b_blk * T * F * itemsize
                 + 3 * b_blk * T * F * 4
                 + (F * F + 2 * F + F * U + U) * w_itemsize
                 + 2 * b_blk * (T * 4 + U * o_itemsize))
    vmem_limit = int(min(48 << 20, max(16 << 20, (vmem_need * 3) // 2)))

    grid_spec = pltpu.PrefetchScalarGridSpec(
        num_scalar_prefetch=0,
        grid=(n_steps,),
        in_specs=[
            # x is the only streamed operand (default double-buffering).
            pl.BlockSpec((b_blk, T, F), lambda i: (i, 0, 0)),
            # Grid-invariant weights: single-buffered (no second VMEM copy).
            pl.BlockSpec((F, F), lambda i: (0, 0),
                         pipeline_mode=pl.Buffered(1)),
            pl.BlockSpec((1, F), lambda i: (0, 0),
                         pipeline_mode=pl.Buffered(1)),
            pl.BlockSpec((1, F), lambda i: (0, 0),
                         pipeline_mode=pl.Buffered(1)),
            pl.BlockSpec((F, U), lambda i: (0, 0),
                         pipeline_mode=pl.Buffered(1)),
            pl.BlockSpec((1, U), lambda i: (0, 0),
                         pipeline_mode=pl.Buffered(1)),
        ],
        out_specs=[
            pl.BlockSpec((U, b_blk), lambda i: (0, i)),   # o^T, lane-dense
            pl.BlockSpec((T, b_blk), lambda i: (0, i)),   # ai^T, lane-dense
        ],
    )

    o_t, ai_t = pl.pallas_call(
        _self_attn_kernel,
        out_shape=(
            jax.ShapeDtypeStruct((U, Bp), out_o_dtype),
            jax.ShapeDtypeStruct((T, Bp), jnp.float32),   # ai stays f32
        ),
        grid_spec=grid_spec,
        compiler_params=pltpu.CompilerParams(
            dimension_semantics=("parallel",),            # batch blocks shard TCs
            vmem_limit_bytes=vmem_limit,
        ),
    )(x, W, b2, v_row, We, be2)

    o = jnp.transpose(o_t)[:B]                        # (B, U)
    ai = jnp.transpose(ai_t)[:B].reshape(B, T, 1)     # PyTorch (B, T, 1)
    return o, ai


def self_attn_v2_ref(x, W, b, V, We, be):
    """Pure-JAX reference mirroring the PyTorch forward."""
    ui = jnp.tanh(jnp.matmul(x, W) + b)
    logits = jnp.matmul(ui, V)                        # (B, T, 1)
    ai = jax.nn.softmax(logits, axis=1)
    o = jnp.sum(x * ai, axis=1)                       # (B, F)
    o = jnp.matmul(o, We) + be                        # (B, U)
    return o, ai


if __name__ == "__main__":
    B, T, F, UNITS = 16, 8, 128, 32

    key = jax.random.PRNGKey(0)
    kx, kw, kv, kwe, kbe = jax.random.split(key, 5)

    x = jax.random.normal(kx, (B, T, F), dtype=jnp.float32)
    # Parameters matching the module: W ~ N(0,1), b = 0, V ~ U(0,1),
    # embedding Linear(fdim -> units) stored as (F, U) so o @ We + be.
    W = jax.random.normal(kw, (F, F), dtype=jnp.float32)
    b = jnp.zeros((F,), dtype=jnp.float32)
    V = jax.random.uniform(kv, (F, 1), dtype=jnp.float32)
    We = jax.random.normal(kwe, (F, UNITS), dtype=jnp.float32) * 0.1
    be = jax.random.normal(kbe, (UNITS,), dtype=jnp.float32) * 0.1

    # f32 path.  b_blk auto-selects a single grid step at this tiny size
    # (64 KiB of x), so the whole problem is resident and pipeline overhead
    # is paid exactly once.
    o, ai = self_attn_v2(x, W, b, V, We, be)
    o = jax.block_until_ready(o)
    ai = jax.block_until_ready(ai)

    o_ref, ai_ref = self_attn_v2_ref(x, W, b, V, We, be)
    assert o.shape == (B, UNITS) and ai.shape == (B, T, 1)
    assert jnp.allclose(o, o_ref, atol=1e-2, rtol=1e-2), "o mismatch"
    assert jnp.allclose(ai, ai_ref, atol=5e-3, rtol=5e-3), "ai mismatch"

    # bf16 streaming path (the op is HBM-bound on every generation, so halving
    # x/W bytes is the main lever for large B).  f32 accumulation + f32 ai.
    # Smoke-check only: bf16 matmul/tanh inputs make tight tolerances moot.
    o16, ai16 = self_attn_v2(
        x.astype(jnp.bfloat16), W.astype(jnp.bfloat16), b.astype(jnp.bfloat16),
        V.astype(jnp.bfloat16), We.astype(jnp.bfloat16), be.astype(jnp.bfloat16))
    o16 = jax.block_until_ready(o16)
    ai16 = jax.block_until_ready(ai16)
    assert o16.shape == (B, UNITS) and ai16.shape == (B, T, 1)
    assert bool(jnp.all(jnp.isfinite(o16.astype(jnp.float32))))
    assert bool(jnp.all(jnp.isfinite(ai16)))

    print("KERNEL_OK")
</pallas_src>

<mosaic_0001>
module attributes {stable_mosaic.version = 11 : i64} {
  func.func @_self_attn_kernel(%arg0: i32, %arg1: memref<16x8x128xf32, #tpu.memory_space<vmem>>, %arg2: memref<128x128xf32, #tpu.memory_space<vmem>>, %arg3: memref<1x128xf32, #tpu.memory_space<vmem>>, %arg4: memref<1x128xf32, #tpu.memory_space<vmem>>, %arg5: memref<128x32xf32, #tpu.memory_space<vmem>>, %arg6: memref<1x32xf32, #tpu.memory_space<vmem>>, %arg7: memref<32x16xf32, #tpu.memory_space<vmem>>, %arg8: memref<8x16xf32, #tpu.memory_space<vmem>>) attributes {dimension_semantics = [#tpu.dimension_semantics<parallel>], iteration_bounds = array<i64: 1>, scalar_prefetch = 0 : i64, scratch_operands = 0 : i64, tpu.core_type = #tpu.core_type<tc>, window_params = [{transform_indices = @transform_0, window_bounds = array<i64: 16, 8, 128>}, {pipeline_mode = #tpu.pipeline_mode<synchronous>, transform_indices = @transform_1, window_bounds = array<i64: 128, 128>}, {pipeline_mode = #tpu.pipeline_mode<synchronous>, transform_indices = @transform_2, window_bounds = array<i64: 1, 128>}, {pipeline_mode = #tpu.pipeline_mode<synchronous>, transform_indices = @transform_3, window_bounds = array<i64: 1, 128>}, {pipeline_mode = #tpu.pipeline_mode<synchronous>, transform_indices = @transform_4, window_bounds = array<i64: 128, 32>}, {pipeline_mode = #tpu.pipeline_mode<synchronous>, transform_indices = @transform_5, window_bounds = array<i64: 1, 32>}, {transform_indices = @transform_6, window_bounds = array<i64: 32, 16>}, {transform_indices = @transform_7, window_bounds = array<i64: 8, 16>}]} {
    %c0 = arith.constant 0 : index
    %c0_0 = arith.constant 0 : index
    %c0_1 = arith.constant 0 : index
    %0 = vector.load %arg1[%c0, %c0_0, %c0_1] : memref<16x8x128xf32, #tpu.memory_space<vmem>>, vector<16x8x128xf32>
    %1 = vector.shape_cast %0 : vector<16x8x128xf32> to vector<128x128xf32>
    %c0_2 = arith.constant 0 : index
    %c0_3 = arith.constant 0 : index
    %2 = vector.load %arg2[%c0_2, %c0_3] : memref<128x128xf32, #tpu.memory_space<vmem>>, vector<128x128xf32>
    %cst = arith.constant dense<0.000000e+00> : vector<128x128xf32>
    %3 = tpu.matmul %1, %2, %cst {dimension_numbers = #tpu.dot_dimension_numbers<[1], [0], [0], [1], [0, 0, 1, 1], [], []>} : vector<128x128xf32>, vector<128x128xf32>, vector<128x128xf32> -> vector<128x128xf32>
    %c0_4 = arith.constant 0 : index
    %c0_5 = arith.constant 0 : index
    %4 = vector.load %arg3[%c0_4, %c0_5] : memref<1x128xf32, #tpu.memory_space<vmem>>, vector<1x128xf32>
    %5 = vector.broadcast %4 : vector<1x128xf32> to vector<128x128xf32>
    %6 = arith.addf %3, %5 : vector<128x128xf32>
    %7 = math.tanh %6 : vector<128x128xf32>
    %8 = vector.shape_cast %7 : vector<128x128xf32> to vector<16x8x128xf32>
    %c0_6 = arith.constant 0 : index
    %c0_7 = arith.constant 0 : index
    %9 = vector.load %arg4[%c0_6, %c0_7] : memref<1x128xf32, #tpu.memory_space<vmem>>, vector<1x128xf32>
    %10 = vector.shape_cast %9 : vector<1x128xf32> to vector<1x1x128xf32>
    %11 = vector.broadcast %10 : vector<1x1x128xf32> to vector<16x8x128xf32>
    %12 = arith.mulf %8, %11 : vector<16x8x128xf32>
    %cst_8 = arith.constant dense<0.000000e+00> : vector<16x8xf32>
    %13 = vector.multi_reduction <add>, %12, %cst_8 [2] : vector<16x8x128xf32> to vector<16x8xf32>
    %cst_9 = arith.constant dense<0xFF800000> : vector<16xf32>
    %14 = vector.multi_reduction <maximumf>, %13, %cst_9 [1] : vector<16x8xf32> to vector<16xf32>
    %15 = vector.shape_cast %14 : vector<16xf32> to vector<16x1xf32>
    %16 = vector.broadcast %15 : vector<16x1xf32> to vector<16x8xf32>
    %17 = arith.subf %13, %16 : vector<16x8xf32>
    %18 = math.exp %17 : vector<16x8xf32>
    %cst_10 = arith.constant dense<0.000000e+00> : vector<16xf32>
    %19 = vector.multi_reduction <add>, %18, %cst_10 [1] : vector<16x8xf32> to vector<16xf32>
    %20 = vector.shape_cast %19 : vector<16xf32> to vector<16x1xf32>
    %21 = vector.broadcast %20 : vector<16x1xf32> to vector<16x8xf32>
    %22 = arith.divf %18, %21 : vector<16x8xf32>
    %23 = vector.shape_cast %22 : vector<16x8xf32> to vector<16x8x1xf32>
    %24 = vector.broadcast %23 : vector<16x8x1xf32> to vector<16x8x128xf32>
    %25 = arith.mulf %0, %24 : vector<16x8x128xf32>
    %cst_11 = arith.constant dense<0.000000e+00> : vector<16x128xf32>
    %26 = vector.multi_reduction <add>, %25, %cst_11 [1] : vector<16x8x128xf32> to vector<16x128xf32>
    %c0_12 = arith.constant 0 : index
    %c0_13 = arith.constant 0 : index
    %27 = vector.load %arg5[%c0_12, %c0_13] : memref<128x32xf32, #tpu.memory_space<vmem>>, vector<128x32xf32>
    %cst_14 = arith.constant dense<0.000000e+00> : vector<16x32xf32>
    %28 = tpu.matmul %26, %27, %cst_14 {dimension_numbers = #tpu.dot_dimension_numbers<[1], [0], [0], [1], [0, 0, 1, 1], [], []>} : vector<16x128xf32>, vector<128x32xf32>, vector<16x32xf32> -> vector<16x32xf32>
    %c0_15 = arith.constant 0 : index
    %c0_16 = arith.constant 0 : index
    %29 = vector.load %arg6[%c0_15, %c0_16] : memref<1x32xf32, #tpu.memory_space<vmem>>, vector<1x32xf32>
    %30 = vector.broadcast %29 : vector<1x32xf32> to vector<16x32xf32>
    %31 = arith.addf %28, %30 : vector<16x32xf32>
    %32 = tpu.transpose %22, [1, 0] : vector<16x8xf32> -> vector<8x16xf32>
    %c0_17 = arith.constant 0 : index
    %c0_18 = arith.constant 0 : index
    %33 = vector.load %arg8[%c0_17, %c0_18] : memref<8x16xf32, #tpu.memory_space<vmem>>, vector<8x16xf32>
    tpu.vector_store %arg8[%c0_17, %c0_18], %32 {strides = array<i32>} : memref<8x16xf32, #tpu.memory_space<vmem>>, vector<8x16xf32>,
    %34 = tpu.transpose %31, [1, 0] : vector<16x32xf32> -> vector<32x16xf32>
    %c0_19 = arith.constant 0 : index
    %c0_20 = arith.constant 0 : index
    %35 = vector.load %arg7[%c0_19, %c0_20] : memref<32x16xf32, #tpu.memory_space<vmem>>, vector<32x16xf32>
    tpu.vector_store %arg7[%c0_19, %c0_20], %34 {strides = array<i32>} : memref<32x16xf32, #tpu.memory_space<vmem>>, vector<32x16xf32>,
    return
  }
  func.func @transform_0(%arg0: i32) -> (i32, i32, i32) {
    %c0_i32 = arith.constant 0 : i32
    %c0_i32_0 = arith.constant 0 : i32
    %c0_i32_1 = arith.constant 0 : i32
    return %arg0, %c0_i32, %c0_i32_0 : i32, i32, i32
  }
  func.func @transform_1(%arg0: i32) -> (i32, i32) {
    %c0_i32 = arith.constant 0 : i32
    %c0_i32_0 = arith.constant 0 : i32
    %c0_i32_1 = arith.constant 0 : i32
    return %c0_i32, %c0_i32_0 : i32, i32
  }
  func.func @transform_2(%arg0: i32) -> (i32, i32) {
    %c0_i32 = arith.constant 0 : i32
    %c0_i32_0 = arith.constant 0 : i32
    %c0_i32_1 = arith.constant 0 : i32
    return %c0_i32, %c0_i32_0 : i32, i32
  }
  func.func @transform_3(%arg0: i32) -> (i32, i32) {
    %c0_i32 = arith.constant 0 : i32
    %c0_i32_0 = arith.constant 0 : i32
    %c0_i32_1 = arith.constant 0 : i32
    return %c0_i32, %c0_i32_0 : i32, i32
  }
  func.func @transform_4(%arg0: i32) -> (i32, i32) {
    %c0_i32 = arith.constant 0 : i32
    %c0_i32_0 = arith.constant 0 : i32
    %c0_i32_1 = arith.constant 0 : i32
    return %c0_i32, %c0_i32_0 : i32, i32
  }
  func.func @transform_5(%arg0: i32) -> (i32, i32) {
    %c0_i32 = arith.constant 0 : i32
    %c0_i32_0 = arith.constant 0 : i32
    %c0_i32_1 = arith.constant 0 : i32
    return %c0_i32, %c0_i32_0 : i32, i32
  }
  func.func @transform_6(%arg0: i32) -> (i32, i32) {
    %c0_i32 = arith.constant 0 : i32
    %c0_i32_0 = arith.constant 0 : i32
    return %c0_i32, %arg0 : i32, i32
  }
  func.func @transform_7(%arg0: i32) -> (i32, i32) {
    %c0_i32 = arith.constant 0 : i32
    %c0_i32_0 = arith.constant 0 : i32
    return %c0_i32, %arg0 : i32, i32
  }
}

</mosaic_0001>

<llo_original>
// kernel: tpu_custom_call.1
$region0: #{tpu_custom_call.1}
  #allocation0 [shape = 'u32[]', space=smem, size = 0x4, offset = 0x4, fixed_abs, tag = 'smem constant byte address 0x4 - core index']
  #allocation1 [shape = 'u32[72,128]{1,0:T(1,128)}', space=vmem, size = 0x9000, scoped, tag = 'internal scratch']
  %s0 = inlined_call_operand.vmem [shape: f32[16,8,128], index: 0, kind: input, shape index: {}]
  %s1 = inlined_call_operand.hbm [shape: f32[128,128], index: 1, kind: input, shape index: {}]
  %s2 = inlined_call_operand.vmem [shape: f32[1,128], index: 2, kind: input, shape index: {}]
  %s3 = inlined_call_operand.vmem [shape: f32[1,128], index: 3, kind: input, shape index: {}]
  %s4 = inlined_call_operand.vmem [shape: f32[128,32], index: 4, kind: input, shape index: {}]
  %s5 = inlined_call_operand.vmem [shape: f32[1,32], index: 5, kind: input, shape index: {}]
  %s6 = inlined_call_operand.vmem [shape: f32[32,16], index: 6, kind: output, shape index: {0}]
  %s7 = inlined_call_operand.hbm [shape: f32[8,16], index: 7, kind: output, shape index: {1}]
  %8 = xla_tuple %s6, %s7
  %s9 = sld [smem:[#allocation0]]
  $region46: #{tpu_custom_call.1} parent=0
    _
  %s11 = ssub.s32 1, %s9
  %s12 = scalar_select 0, %s11, %s9
  $region1: #{tpu_custom_call.1} parent=0
    #allocation2 [shape = 'u8[65536]{0}', space=vmem, size = 0x10000, scoped, tag = 'input window, operand 1, single buffered']
    #allocation3 [shape = 's32[1]{0}', space=sflag, size = 0x4, scoped, tag = 'scoped memory for tpu_custom_call.1']
    #allocation4 [shape = 's32[1]{0}', space=sflag, size = 0x4, scoped, tag = 'scoped memory for tpu_custom_call.1']
    #allocation5 [shape = 'u8[4096]{0}', space=vmem, size = 0x1000, scoped, tag = 'output window, operand 1, single buffered']
    %13 = vsyncpa [#allocation3], 0
    %14 = vsyncpa [#allocation4], 0
    // Predicated region
    $region2: #{tpu_custom_call.1} parent=1 // pred_check
      _
    $region3: #{tpu_custom_call.1} parent=1 // pred_check_branch
      %16 = sbr.rel (0) target = $region5
    $region4: #{tpu_custom_call.1} parent=1 // pred_region
      _
    $region5: #{tpu_custom_call.1} parent=1 // pred_fallthru
      _
    // Predicated region
    $region6: #{tpu_custom_call.1} parent=1 // pred_check
      _
    $region7: #{tpu_custom_call.1} parent=1 // pred_check_branch
      %18 = sbr.rel (0) target = $region9
    $region8: #{tpu_custom_call.1} parent=1 // pred_region
      %20 = vsyncadd [#allocation3], 0
      %s21 = sshll.u32 %s1, 4
      %s22 = int_to_ptr.hbm [resolvable:$true] %s21
      %s23 = sshll.u32 [#allocation2], 4
      %s24 = int_to_ptr.vmem [resolvable:$true] %s23
      %29 = dma.hbm_to_vmem [thread:$0]  %s22, 2048, %s24, [#allocation3], 128, 128, 8
    $region9: #{tpu_custom_call.1} parent=1 // pred_fallthru
      _
    // Predicated region
    $region10: #{tpu_custom_call.1} parent=1 // pred_check
      _
    $region11: #{tpu_custom_call.1} parent=1 // pred_check_branch
      %31 = sbr.rel (0) target = $region13
    $region12: #{tpu_custom_call.1} parent=1 // pred_region
      _
    $region13: #{tpu_custom_call.1} parent=1 // pred_fallthru
      _
    // Predicated region
    $region14: #{tpu_custom_call.1} parent=1 // pred_check
      _
    $region15: #{tpu_custom_call.1} parent=1 // pred_check_branch
      %33 = sbr.rel (0) target = $region17
    $region16: #{tpu_custom_call.1} parent=1 // pred_region
      _
    $region17: #{tpu_custom_call.1} parent=1 // pred_fallthru
      _
    // Predicated region
    $region18: #{tpu_custom_call.1} parent=1 // pred_check
      _
    $region19: #{tpu_custom_call.1} parent=1 // pred_check_branch
      %35 = sbr.rel (0) target = $region21
    $region20: #{tpu_custom_call.1} parent=1 // pred_region
      _
    $region21: #{tpu_custom_call.1} parent=1 // pred_fallthru
      _
    // Predicated region
    $region22: #{tpu_custom_call.1} parent=1 // pred_check
      _
    $region23: #{tpu_custom_call.1} parent=1 // pred_check_branch
      %37 = sbr.rel (0) target = $region25
    $region24: #{tpu_custom_call.1} parent=1 // pred_region
      _
    $region25: #{tpu_custom_call.1} parent=1 // pred_fallthru
      _
    // Predicated region
    $region26: #{tpu_custom_call.1} parent=1 // pred_check
      _
    $region27: #{tpu_custom_call.1} parent=1 // pred_check_branch
      %39 = sbr.rel (0) target = $region29
    $region28: #{tpu_custom_call.1} parent=1 // pred_region
      %41 = dma.done [#allocation3], 2048
    $region29: #{tpu_custom_call.1} parent=1 // pred_fallthru
      _
    %v42 = vld [vmem:[%s0] sm:$0xff]
    %v43 = vld [vmem:[%s0 + $0x8] sm:$0xff]
    %v44 = vld [vmem:[%s0 + $0x10] sm:$0xff]
    %v45 = vld [vmem:[%s0 + $0x18] sm:$0xff]
    %v46 = vld [vmem:[%s0 + $0x20] sm:$0xff]
    %v47 = vld [vmem:[%s0 + $0x28] sm:$0xff]
    %v48 = vld [vmem:[%s0 + $0x30] sm:$0xff]
    %v49 = vld [vmem:[%s0 + $0x38] sm:$0xff]
    %v50 = vld [vmem:[%s0 + $0x40] sm:$0xff]
    %v51 = vld [vmem:[%s0 + $0x48] sm:$0xff]
    %v52 = vld [vmem:[%s0 + $0x50] sm:$0xff]
    %v53 = vld [vmem:[%s0 + $0x58] sm:$0xff]
    %v54 = vld [vmem:[%s0 + $0x60] sm:$0xff]
    %v55 = vld [vmem:[%s0 + $0x68] sm:$0xff]
    %v56 = vld [vmem:[%s0 + $0x70] sm:$0xff]
    %v57 = vld [vmem:[%s0 + $0x78] sm:$0xff]
    %v58 = vld [vmem:[#allocation2] sm:$0xff]
    %v59 = vld [vmem:[#allocation2 + $0x8] sm:$0xff]
    %v60 = vld [vmem:[#allocation2 + $0x10] sm:$0xff]
    %v61 = vld [vmem:[#allocation2 + $0x18] sm:$0xff]
    %v62 = vld [vmem:[#allocation2 + $0x20] sm:$0xff]
    %v63 = vld [vmem:[#allocation2 + $0x28] sm:$0xff]
    %v64 = vld [vmem:[#allocation2 + $0x30] sm:$0xff]
    %v65 = vld [vmem:[#allocation2 + $0x38] sm:$0xff]
    %v66 = vld [vmem:[#allocation2 + $0x40] sm:$0xff]
    %v67 = vld [vmem:[#allocation2 + $0x48] sm:$0xff]
    %v68 = vld [vmem:[#allocation2 + $0x50] sm:$0xff]
    %v69 = vld [vmem:[#allocation2 + $0x58] sm:$0xff]
    %v70 = vld [vmem:[#allocation2 + $0x60] sm:$0xff]
    %v71 = vld [vmem:[#allocation2 + $0x68] sm:$0xff]
    %v72 = vld [vmem:[#allocation2 + $0x70] sm:$0xff]
    %v73 = vld [vmem:[#allocation2 + $0x78] sm:$0xff]
    %v74 = vld [vmem:[%s2] sm:$0x1]
    %v76 = vperm.slane %v74, 0
    %78 = vmatpush.msra.mxu0 %v73
    %79 = vmatpush.msra.mxu0 %v72
    %80 = vmatpush.msra.mxu0 %v71
    %81 = vmatpush.msra.mxu0 %v70
    %82 = vmatpush.msra.mxu0 %v69
    %83 = vmatpush.msra.mxu0 %v68
    %84 = vmatpush.msra.mxu0 %v67
    %85 = vmatpush.msra.mxu0 %v66
    %86 = vmatpush.msra.mxu0 %v65
    %87 = vmatpush.msra.mxu0 %v64
    %88 = vmatpush.msra.mxu0 %v63
    %89 = vmatpush.msra.mxu0 %v62
    %90 = vmatpush.msra.mxu0 %v61
    %91 = vmatpush.msra.mxu0 %v60
    %92 = vmatpush.msra.mxu0 %v59
    %93 = vmatpush.msra.mxu0 %v58
    %94 = vmatmul.f32.gmra.mxu0 %v42
    %v95 = vpop.f32.mrf.mxu0
    %v96 = vadd.f32 %v76, %v95
    %97 = vmatmul.f32.gmra.mxu0 %v43
    %v98 = vpop.f32.mrf.mxu0
    %v99 = vadd.f32 %v76, %v98
    %100 = vmatmul.f32.gmra.mxu0 %v44
    %v101 = vpop.f32.mrf.mxu0
    %v102 = vadd.f32 %v76, %v101
    %103 = vmatmul.f32.gmra.mxu0 %v45
    %v104 = vpop.f32.mrf.mxu0
    %v105 = vadd.f32 %v76, %v104
    %106 = vmatmul.f32.gmra.mxu0 %v46
    %v107 = vpop.f32.mrf.mxu0
    %v108 = vadd.f32 %v76, %v107
    %109 = vmatmul.f32.gmra.mxu0 %v47
    %v110 = vpop.f32.mrf.mxu0
    %v111 = vadd.f32 %v76, %v110
    %112 = vmatmul.f32.gmra.mxu0 %v48
    %v113 = vpop.f32.mrf.mxu0
    %v114 = vadd.f32 %v76, %v113
    %115 = vmatmul.f32.gmra.mxu0 %v49
    %v116 = vpop.f32.mrf.mxu0
    %v117 = vadd.f32 %v76, %v116
    %118 = vmatmul.f32.gmra.mxu0 %v50
    %v119 = vpop.f32.mrf.mxu0
    %v120 = vadd.f32 %v76, %v119
    %121 = vmatmul.f32.gmra.mxu0 %v51
    %v122 = vpop.f32.mrf.mxu0
    %v123 = vadd.f32 %v76, %v122
    %124 = vmatmul.f32.gmra.mxu0 %v52
    %v125 = vpop.f32.mrf.mxu0
    %v126 = vadd.f32 %v76, %v125
    %127 = vmatmul.f32.gmra.mxu0 %v53
    %v128 = vpop.f32.mrf.mxu0
    %v129 = vadd.f32 %v76, %v128
    %130 = vmatmul.f32.gmra.mxu0 %v54
    %v131 = vpop.f32.mrf.mxu0
    %v132 = vadd.f32 %v76, %v131
    %133 = vmatmul.f32.gmra.mxu0 %v55
    %v134 = vpop.f32.mrf.mxu0
    %v135 = vadd.f32 %v76, %v134
    %136 = vmatmul.f32.gmra.mxu0 %v56
    %v137 = vpop.f32.mrf.mxu0
    %v138 = vadd.f32 %v76, %v137
    %139 = vmatmul.f32.gmra.mxu0 %v57
    %v140 = vpop.f32.mrf.mxu0
    %v141 = vadd.f32 %v76, %v140
    %142 = vdwg.mxu0
    %v143 = vtanh.pop %v96
    %v144 = vtanh.pop %v99
    %v145 = vtanh.pop %v102
    %v146 = vtanh.pop %v105
    %v147 = vtanh.pop %v108
    %v148 = vtanh.pop %v111
    %v149 = vtanh.pop %v114
    %v150 = vtanh.pop %v117
    %v151 = vtanh.pop %v120
    %v152 = vtanh.pop %v123
    %v153 = vtanh.pop %v126
    %v154 = vtanh.pop %v129
    %v155 = vtanh.pop %v132
    %v156 = vtanh.pop %v135
    %v157 = vtanh.pop %v138
    %v158 = vtanh.pop %v141
    %v159 = vld [vmem:[%s3] sm:$0x1]
    %v161 = vperm.slane %v159, 0
    %v163 = vmul.f32 %v143, %v161
    %v164 = vmul.f32 %v144, %v161
    %v165 = vmul.f32 %v145, %v161
    %v166 = vmul.f32 %v146, %v161
    %v167 = vmul.f32 %v147, %v161
    %v168 = vmul.f32 %v148, %v161
    %v169 = vmul.f32 %v149, %v161
    %v170 = vmul.f32 %v150, %v161
    %v171 = vmul.f32 %v151, %v161
    %v172 = vmul.f32 %v152, %v161
    %v173 = vmul.f32 %v153, %v161
    %v174 = vmul.f32 %v154, %v161
    %v175 = vmul.f32 %v155, %v161
    %v176 = vmul.f32 %v156, %v161
    %v177 = vmul.f32 %v157, %v161
    %v178 = vmul.f32 %v158, %v161
    %179 = vadd.xlane.f32.xlu0 %v163
    %v180 = vpop.xlane.xlu0 %179
    %181 = vadd.xlane.f32.xlu0 %v164
    %v182 = vpop.xlane.xlu0 %181
    %183 = vadd.xlane.f32.xlu0 %v165
    %v184 = vpop.xlane.xlu0 %183
    %185 = vadd.xlane.f32.xlu0 %v166
    %v186 = vpop.xlane.xlu0 %185
    %187 = vadd.xlane.f32.xlu0 %v167
    %v188 = vpop.xlane.xlu0 %187
    %189 = vadd.xlane.f32.xlu0 %v168
    %v190 = vpop.xlane.xlu0 %189
    %191 = vadd.xlane.f32.xlu0 %v169
    %v192 = vpop.xlane.xlu0 %191
    %193 = vadd.xlane.f32.xlu0 %v170
    %v194 = vpop.xlane.xlu0 %193
    %195 = vadd.xlane.f32.xlu0 %v171
    %v196 = vpop.xlane.xlu0 %195
    %197 = vadd.xlane.f32.xlu0 %v172
    %v198 = vpop.xlane.xlu0 %197
    %199 = vadd.xlane.f32.xlu0 %v173
    %v200 = vpop.xlane.xlu0 %199
    %201 = vadd.xlane.f32.xlu0 %v174
    %v202 = vpop.xlane.xlu0 %201
    %203 = vadd.xlane.f32.xlu0 %v175
    %v204 = vpop.xlane.xlu0 %203
    %205 = vadd.xlane.f32.xlu0 %v176
    %v206 = vpop.xlane.xlu0 %205
    %207 = vadd.xlane.f32.xlu0 %v177
    %v208 = vpop.xlane.xlu0 %207
    %209 = vadd.xlane.f32.xlu0 %v178
    %v210 = vpop.xlane.xlu0 %209
    %v227 = vlaneseq
    %v228 = vand.u32 %v227, 127
    %v229 = vperm.slane %v180, %v228
    %v230 = vperm.slane %v182, %v228
    %v231 = vperm.slane %v184, %v228
    %v232 = vperm.slane %v186, %v228
    %v233 = vperm.slane %v188, %v228
    %v234 = vperm.slane %v190, %v228
    %v235 = vperm.slane %v192, %v228
    %v236 = vperm.slane %v194, %v228
    %v237 = vperm.slane %v196, %v228
    %v238 = vperm.slane %v198, %v228
    %v239 = vperm.slane %v200, %v228
    %v240 = vperm.slane %v202, %v228
    %v241 = vperm.slane %v204, %v228
    %v242 = vperm.slane %v206, %v228
    %v243 = vperm.slane %v208, %v228
    %v244 = vperm.slane %v210, %v228
    %vm245 = vcmask 1041409
    %v246 = vsel %vm245, %v230, %v229
    %vm247 = vcmask 1042434
    %v248 = vsel %vm247, %v231, %v246
    %vm249 = vcmask 1043459
    %v250 = vsel %vm249, %v232, %v248
    %vm251 = vcmask 1044484
    %v252 = vsel %vm251, %v233, %v250
    %vm253 = vcmask 1045509
    %v254 = vsel %vm253, %v234, %v252
    %vm255 = vcmask 1046534
    %v256 = vsel %vm255, %v235, %v254
    %vm257 = vcmask 1047559
    %v258 = vsel %vm257, %v236, %v256
    %v259 = vsel %vm245, %v238, %v237
    %v260 = vsel %vm247, %v239, %v259
    %v261 = vsel %vm249, %v240, %v260
    %v262 = vsel %vm251, %v241, %v261
    %v263 = vsel %vm253, %v242, %v262
    %v264 = vsel %vm255, %v243, %v263
    %v265 = vsel %vm257, %v244, %v264
    %vm268 = vcmask 64512
    %v269 = vsel %vm268, %v258, -inf
    %270 = vmax.xlane.f32.xlu0 %v269
    %v271 = vpop.xlane.xlu0 %270
    %v272 = vsel %vm268, %v265, -inf
    %273 = vmax.xlane.f32.xlu0 %v272
    %v274 = vpop.xlane.xlu0 %273
    %v277 = vperm.slane %v271, 0
    %v278 = vperm.slane %v271, 1
    %v279 = vperm.slane %v271, 2
    %v280 = vperm.slane %v271, 3
    %v281 = vperm.slane %v271, 4
    %v282 = vperm.slane %v271, 5
    %v283 = vperm.slane %v271, 6
    %v284 = vperm.slane %v271, 7
    %v285 = vperm.slane %v274, 0
    %v286 = vperm.slane %v274, 1
    %v287 = vperm.slane %v274, 2
    %v288 = vperm.slane %v274, 3
    %v289 = vperm.slane %v274, 4
    %v290 = vperm.slane %v274, 5
    %v291 = vperm.slane %v274, 6
    %v292 = vperm.slane %v274, 7
    %v309 = vsub.f32 %v180, %v277
    %v310 = vsub.f32 %v182, %v278
    %v311 = vsub.f32 %v184, %v279
    %v312 = vsub.f32 %v186, %v280
    %v313 = vsub.f32 %v188, %v281
    %v314 = vsub.f32 %v190, %v282
    %v315 = vsub.f32 %v192, %v283
    %v316 = vsub.f32 %v194, %v284
    %v317 = vsub.f32 %v196, %v285
    %v318 = vsub.f32 %v198, %v286
    %v319 = vsub.f32 %v200, %v287
    %v320 = vsub.f32 %v202, %v288
    %v321 = vsub.f32 %v204, %v289
    %v322 = vsub.f32 %v206, %v290
    %v323 = vsub.f32 %v208, %v291
    %v324 = vsub.f32 %v210, %v292
    %v325 = vmul.f32 %v309, 1.442695
    %v326 = vpow.pop %v325
    %v327 = vmul.f32 %v310, 1.442695
    %v328 = vpow.pop %v327
    %v329 = vmul.f32 %v311, 1.442695
    %v330 = vpow.pop %v329
    %v331 = vmul.f32 %v312, 1.442695
    %v332 = vpow.pop %v331
    %v333 = vmul.f32 %v313, 1.442695
    %v334 = vpow.pop %v333
    %v335 = vmul.f32 %v314, 1.442695
    %v336 = vpow.pop %v335
    %v337 = vmul.f32 %v315, 1.442695
    %v338 = vpow.pop %v337
    %v339 = vmul.f32 %v316, 1.442695
    %v340 = vpow.pop %v339
    %v341 = vmul.f32 %v317, 1.442695
    %v342 = vpow.pop %v341
    %v343 = vmul.f32 %v318, 1.442695
    %v344 = vpow.pop %v343
    %v345 = vmul.f32 %v319, 1.442695
    %v346 = vpow.pop %v345
    %v347 = vmul.f32 %v320, 1.442695
    %v348 = vpow.pop %v347
    %v349 = vmul.f32 %v321, 1.442695
    %v350 = vpow.pop %v349
    %v351 = vmul.f32 %v322, 1.442695
    %v352 = vpow.pop %v351
    %v353 = vmul.f32 %v323, 1.442695
    %v354 = vpow.pop %v353
    %v355 = vmul.f32 %v324, 1.442695
    %v356 = vpow.pop %v355
    %373 = vset.pattern.permute.xlu0 0
    %374 = vperm.xlu0 %373, %v326
    %v375 = vpop.permute.xlu0 %374
    %376 = vset.pattern.permute.xlu0 0
    %377 = vperm.xlu0 %376, %v328
    %v378 = vpop.permute.xlu0 %377
    %379 = vset.pattern.permute.xlu0 0
    %380 = vperm.xlu0 %379, %v330
    %v381 = vpop.permute.xlu0 %380
    %382 = vset.pattern.permute.xlu0 0
    %383 = vperm.xlu0 %382, %v332
    %v384 = vpop.permute.xlu0 %383
    %385 = vset.pattern.permute.xlu0 0
    %386 = vperm.xlu0 %385, %v334
    %v387 = vpop.permute.xlu0 %386
    %388 = vset.pattern.permute.xlu0 0
    %389 = vperm.xlu0 %388, %v336
    %v390 = vpop.permute.xlu0 %389
    %391 = vset.pattern.permute.xlu0 0
    %392 = vperm.xlu0 %391, %v338
    %v393 = vpop.permute.xlu0 %392
    %394 = vset.pattern.permute.xlu0 0
    %395 = vperm.xlu0 %394, %v340
    %v396 = vpop.permute.xlu0 %395
    %397 = vset.pattern.permute.xlu0 0
    %398 = vperm.xlu0 %397, %v342
    %v399 = vpop.permute.xlu0 %398
    %400 = vset.pattern.permute.xlu0 0
    %401 = vperm.xlu0 %400, %v344
    %v402 = vpop.permute.xlu0 %401
    %403 = vset.pattern.permute.xlu0 0
    %404 = vperm.xlu0 %403, %v346
    %v405 = vpop.permute.xlu0 %404
    %406 = vset.pattern.permute.xlu0 0
    %407 = vperm.xlu0 %406, %v348
    %v408 = vpop.permute.xlu0 %407
    %409 = vset.pattern.permute.xlu0 0
    %410 = vperm.xlu0 %409, %v350
    %v411 = vpop.permute.xlu0 %410
    %412 = vset.pattern.permute.xlu0 0
    %413 = vperm.xlu0 %412, %v352
    %v414 = vpop.permute.xlu0 %413
    %415 = vset.pattern.permute.xlu0 0
    %416 = vperm.xlu0 %415, %v354
    %v417 = vpop.permute.xlu0 %416
    %418 = vset.pattern.permute.xlu0 0
    %419 = vperm.xlu0 %418, %v356
    %v420 = vpop.permute.xlu0 %419
    %v421 = vperm.slane %v375, %v228
    %v422 = vperm.slane %v378, %v228
    %v423 = vperm.slane %v381, %v228
    %v424 = vperm.slane %v384, %v228
    %v425 = vperm.slane %v387, %v228
    %v426 = vperm.slane %v390, %v228
    %v427 = vperm.slane %v393, %v228
    %v428 = vperm.slane %v396, %v228
    %v429 = vperm.slane %v399, %v228
    %v430 = vperm.slane %v402, %v228
    %v431 = vperm.slane %v405, %v228
    %v432 = vperm.slane %v408, %v228
    %v433 = vperm.slane %v411, %v228
    %v434 = vperm.slane %v414, %v228
    %v435 = vperm.slane %v417, %v228
    %v436 = vperm.slane %v420, %v228
    %v437 = vsel %vm245, %v422, %v421
    %v438 = vsel %vm247, %v423, %v437
    %v439 = vsel %vm249, %v424, %v438
    %v440 = vsel %vm251, %v425, %v439
    %v441 = vsel %vm253, %v426, %v440
    %v442 = vsel %vm255, %v427, %v441
    %v443 = vsel %vm257, %v428, %v442
    %v444 = vsel %vm245, %v430, %v429
    %v445 = vsel %vm247, %v431, %v444
    %v446 = vsel %vm249, %v432, %v445
    %v447 = vsel %vm251, %v433, %v446
    %v448 = vsel %vm253, %v434, %v447
    %v449 = vsel %vm255, %v435, %v448
    %v450 = vsel %vm257, %v436, %v449
    %v453 = vsel %vm268, %v443, 0.0
    %454 = vadd.xlane.f32.xlu0 %v453
    %v455 = vpop.xlane.xlu0 %454
    %v456 = vsel %vm268, %v450, 0.0
    %457 = vadd.xlane.f32.xlu0 %v456
    %v458 = vpop.xlane.xlu0 %457
    %v461 = vperm.slane %v455, 0
    %v462 = vperm.slane %v455, 1
    %v463 = vperm.slane %v455, 2
    %v464 = vperm.slane %v455, 3
    %v465 = vperm.slane %v455, 4
    %v466 = vperm.slane %v455, 5
    %v467 = vperm.slane %v455, 6
    %v468 = vperm.slane %v455, 7
    %v469 = vperm.slane %v458, 0
    %v470 = vperm.slane %v458, 1
    %v471 = vperm.slane %v458, 2
    %v472 = vperm.slane %v458, 3
    %v473 = vperm.slane %v458, 4
    %v474 = vperm.slane %v458, 5
    %v475 = vperm.slane %v458, 6
    %v476 = vperm.slane %v458, 7
    %v493 = vrcp.pop %v461
    %v494 = vmul.f32 %v461, %v493
    %v495 = vsub.f32 1.0, %v494
    %v496 = vmul.f32 %v493, %v495
    %v497 = vadd.f32 %v493, %v496
    %vm498 = vweird.f32 %v461
    %vm499 = vweird.f32 %v493
    %vm500 = vmor %vm498, %vm499
    %v501 = vsel %vm500, %v493, %v497
    %v502 = vand.u32 2147483647, %v461
    %vm503 = vcmp.eq.f32.partialorder %v502, 8.507059e+37
    %v504 = vand.u32 %v461, 2147483648
    %v505 = vor.u32 1.1754944e-38, %v504
    %v506 = vsel %vm503, %v505, %v501
    %v507 = vmul.f32 %v326, %v506
    %v508 = vrcp.pop %v462
    %v509 = vmul.f32 %v462, %v508
    %v510 = vsub.f32 1.0, %v509
    %v511 = vmul.f32 %v508, %v510
    %v512 = vadd.f32 %v508, %v511
    %vm513 = vweird.f32 %v462
    %vm514 = vweird.f32 %v508
    %vm515 = vmor %vm513, %vm514
    %v516 = vsel %vm515, %v508, %v512
    %v517 = vand.u32 2147483647, %v462
    %vm518 = vcmp.eq.f32.partialorder %v517, 8.507059e+37
    %v519 = vand.u32 %v462, 2147483648
    %v520 = vor.u32 1.1754944e-38, %v519
    %v521 = vsel %vm518, %v520, %v516
    %v522 = vmul.f32 %v328, %v521
    %v523 = vrcp.pop %v463
    %v524 = vmul.f32 %v463, %v523
    %v525 = vsub.f32 1.0, %v524
    %v526 = vmul.f32 %v523, %v525
    %v527 = vadd.f32 %v523, %v526
    %vm528 = vweird.f32 %v463
    %vm529 = vweird.f32 %v523
    %vm530 = vmor %vm528, %vm529
    %v531 = vsel %vm530, %v523, %v527
    %v532 = vand.u32 2147483647, %v463
    %vm533 = vcmp.eq.f32.partialorder %v532, 8.507059e+37
    %v534 = vand.u32 %v463, 2147483648
    %v535 = vor.u32 1.1754944e-38, %v534
    %v536 = vsel %vm533, %v535, %v531
    %v537 = vmul.f32 %v330, %v536
    %v538 = vrcp.pop %v464
    %v539 = vmul.f32 %v464, %v538
    %v540 = vsub.f32 1.0, %v539
    %v541 = vmul.f32 %v538, %v540
    %v542 = vadd.f32 %v538, %v541
    %vm543 = vweird.f32 %v464
    %vm544 = vweird.f32 %v538
    %vm545 = vmor %vm543, %vm544
    %v546 = vsel %vm545, %v538, %v542
    %v547 = vand.u32 2147483647, %v464
    %vm548 = vcmp.eq.f32.partialorder %v547, 8.507059e+37
    %v549 = vand.u32 %v464, 2147483648
    %v550 = vor.u32 1.1754944e-38, %v549
    %v551 = vsel %vm548, %v550, %v546
    %v552 = vmul.f32 %v332, %v551
    %v553 = vrcp.pop %v465
    %v554 = vmul.f32 %v465, %v553
    %v555 = vsub.f32 1.0, %v554
    %v556 = vmul.f32 %v553, %v555
    %v557 = vadd.f32 %v553, %v556
    %vm558 = vweird.f32 %v465
    %vm559 = vweird.f32 %v553
    %vm560 = vmor %vm558, %vm559
    %v561 = vsel %vm560, %v553, %v557
    %v562 = vand.u32 2147483647, %v465
    %vm563 = vcmp.eq.f32.partialorder %v562, 8.507059e+37
    %v564 = vand.u32 %v465, 2147483648
    %v565 = vor.u32 1.1754944e-38, %v564
    %v566 = vsel %vm563, %v565, %v561
    %v567 = vmul.f32 %v334, %v566
    %v568 = vrcp.pop %v466
    %v569 = vmul.f32 %v466, %v568
    %v570 = vsub.f32 1.0, %v569
    %v571 = vmul.f32 %v568, %v570
    %v572 = vadd.f32 %v568, %v571
    %vm573 = vweird.f32 %v466
    %vm574 = vweird.f32 %v568
    %vm575 = vmor %vm573, %vm574
    %v576 = vsel %vm575, %v568, %v572
    %v577 = vand.u32 2147483647, %v466
    %vm578 = vcmp.eq.f32.partialorder %v577, 8.507059e+37
    %v579 = vand.u32 %v466, 2147483648
    %v580 = vor.u32 1.1754944e-38, %v579
    %v581 = vsel %vm578, %v580, %v576
    %v582 = vmul.f32 %v336, %v581
    %v583 = vrcp.pop %v467
    %v584 = vmul.f32 %v467, %v583
    %v585 = vsub.f32 1.0, %v584
    %v586 = vmul.f32 %v583, %v585
    %v587 = vadd.f32 %v583, %v586
    %vm588 = vweird.f32 %v467
    %vm589 = vweird.f32 %v583
    %vm590 = vmor %vm588, %vm589
    %v591 = vsel %vm590, %v583, %v587
    %v592 = vand.u32 2147483647, %v467
    %vm593 = vcmp.eq.f32.partialorder %v592, 8.507059e+37
    %v594 = vand.u32 %v467, 2147483648
    %v595 = vor.u32 1.1754944e-38, %v594
    %v596 = vsel %vm593, %v595, %v591
    %v597 = vmul.f32 %v338, %v596
    %v598 = vrcp.pop %v468
    %v599 = vmul.f32 %v468, %v598
    %v600 = vsub.f32 1.0, %v599
    %v601 = vmul.f32 %v598, %v600
    %v602 = vadd.f32 %v598, %v601
    %vm603 = vweird.f32 %v468
    %vm604 = vweird.f32 %v598
    %vm605 = vmor %vm603, %vm604
    %v606 = vsel %vm605, %v598, %v602
    %v607 = vand.u32 2147483647, %v468
    %vm608 = vcmp.eq.f32.partialorder %v607, 8.507059e+37
    %v609 = vand.u32 %v468, 2147483648
    %v610 = vor.u32 1.1754944e-38, %v609
    %v611 = vsel %vm608, %v610, %v606
    %v612 = vmul.f32 %v340, %v611
    %v613 = vrcp.pop %v469
    %v614 = vmul.f32 %v469, %v613
    %v615 = vsub.f32 1.0, %v614
    %v616 = vmul.f32 %v613, %v615
    %v617 = vadd.f32 %v613, %v616
    %vm618 = vweird.f32 %v469
    %vm619 = vweird.f32 %v613
    %vm620 = vmor %vm618, %vm619
    %v621 = vsel %vm620, %v613, %v617
    %v622 = vand.u32 2147483647, %v469
    %vm623 = vcmp.eq.f32.partialorder %v622, 8.507059e+37
    %v624 = vand.u32 %v469, 2147483648
    %v625 = vor.u32 1.1754944e-38, %v624
    %v626 = vsel %vm623, %v625, %v621
    %v627 = vmul.f32 %v342, %v626
    %v628 = vrcp.pop %v470
    %v629 = vmul.f32 %v470, %v628
    %v630 = vsub.f32 1.0, %v629
    %v631 = vmul.f32 %v628, %v630
    %v632 = vadd.f32 %v628, %v631
    %vm633 = vweird.f32 %v470
    %vm634 = vweird.f32 %v628
    %vm635 = vmor %vm633, %vm634
    %v636 = vsel %vm635, %v628, %v632
    %v637 = vand.u32 2147483647, %v470
    %vm638 = vcmp.eq.f32.partialorder %v637, 8.507059e+37
    %v639 = vand.u32 %v470, 2147483648
    %v640 = vor.u32 1.1754944e-38, %v639
    %v641 = vsel %vm638, %v640, %v636
    %v642 = vmul.f32 %v344, %v641
    %v643 = vrcp.pop %v471
    %v644 = vmul.f32 %v471, %v643
    %v645 = vsub.f32 1.0, %v644
    %v646 = vmul.f32 %v643, %v645
    %v647 = vadd.f32 %v643, %v646
    %vm648 = vweird.f32 %v471
    %vm649 = vweird.f32 %v643
    %vm650 = vmor %vm648, %vm649
    %v651 = vsel %vm650, %v643, %v647
    %v652 = vand.u32 2147483647, %v471
    %vm653 = vcmp.eq.f32.partialorder %v652, 8.507059e+37
    %v654 = vand.u32 %v471, 2147483648
    %v655 = vor.u32 1.1754944e-38, %v654
    %v656 = vsel %vm653, %v655, %v651
    %v657 = vmul.f32 %v346, %v656
    %v658 = vrcp.pop %v472
    %v659 = vmul.f32 %v472, %v658
    %v660 = vsub.f32 1.0, %v659
    %v661 = vmul.f32 %v658, %v660
    %v662 = vadd.f32 %v658, %v661
    %vm663 = vweird.f32 %v472
    %vm664 = vweird.f32 %v658
    %vm665 = vmor %vm663, %vm664
    %v666 = vsel %vm665, %v658, %v662
    %v667 = vand.u32 2147483647, %v472
    %vm668 = vcmp.eq.f32.partialorder %v667, 8.507059e+37
    %v669 = vand.u32 %v472, 2147483648
    %v670 = vor.u32 1.1754944e-38, %v669
    %v671 = vsel %vm668, %v670, %v666
    %v672 = vmul.f32 %v348, %v671
    %v673 = vrcp.pop %v473
    %v674 = vmul.f32 %v473, %v673
    %v675 = vsub.f32 1.0, %v674
    %v676 = vmul.f32 %v673, %v675
    %v677 = vadd.f32 %v673, %v676
    %vm678 = vweird.f32 %v473
    %vm679 = vweird.f32 %v673
    %vm680 = vmor %vm678, %vm679
    %v681 = vsel %vm680, %v673, %v677
    %v682 = vand.u32 2147483647, %v473
    %vm683 = vcmp.eq.f32.partialorder %v682, 8.507059e+37
    %v684 = vand.u32 %v473, 2147483648
    %v685 = vor.u32 1.1754944e-38, %v684
    %v686 = vsel %vm683, %v685, %v681
    %v687 = vmul.f32 %v350, %v686
    %v688 = vrcp.pop %v474
    %v689 = vmul.f32 %v474, %v688
    %v690 = vsub.f32 1.0, %v689
    %v691 = vmul.f32 %v688, %v690
    %v692 = vadd.f32 %v688, %v691
    %vm693 = vweird.f32 %v474
    %vm694 = vweird.f32 %v688
    %vm695 = vmor %vm693, %vm694
    %v696 = vsel %vm695, %v688, %v692
    %v697 = vand.u32 2147483647, %v474
    %vm698 = vcmp.eq.f32.partialorder %v697, 8.507059e+37
    %v699 = vand.u32 %v474, 2147483648
    %v700 = vor.u32 1.1754944e-38, %v699
    %v701 = vsel %vm698, %v700, %v696
    %v702 = vmul.f32 %v352, %v701
    %v703 = vrcp.pop %v475
    %v704 = vmul.f32 %v475, %v703
    %v705 = vsub.f32 1.0, %v704
    %v706 = vmul.f32 %v703, %v705
    %v707 = vadd.f32 %v703, %v706
    %vm708 = vweird.f32 %v475
    %vm709 = vweird.f32 %v703
    %vm710 = vmor %vm708, %vm709
    %v711 = vsel %vm710, %v703, %v707
    %v712 = vand.u32 2147483647, %v475
    %vm713 = vcmp.eq.f32.partialorder %v712, 8.507059e+37
    %v714 = vand.u32 %v475, 2147483648
    %v715 = vor.u32 1.1754944e-38, %v714
    %v716 = vsel %vm713, %v715, %v711
    %v717 = vmul.f32 %v354, %v716
    %v718 = vrcp.pop %v476
    %v719 = vmul.f32 %v476, %v718
    %v720 = vsub.f32 1.0, %v719
    %v721 = vmul.f32 %v718, %v720
    %v722 = vadd.f32 %v718, %v721
    %vm723 = vweird.f32 %v476
    %vm724 = vweird.f32 %v718
    %vm725 = vmor %vm723, %vm724
    %v726 = vsel %vm725, %v718, %v722
    %v727 = vand.u32 2147483647, %v476
    %vm728 = vcmp.eq.f32.partialorder %v727, 8.507059e+37
    %v729 = vand.u32 %v476, 2147483648
    %v730 = vor.u32 1.1754944e-38, %v729
    %v731 = vsel %vm728, %v730, %v726
    %v732 = vmul.f32 %v356, %v731
    %734 = vset.pattern.permute.xlu0 0
    %735 = vperm.xlu0 %734, %v507
    %v736 = vpop.permute.xlu0 %735
    %739 = vset.pattern.permute.xlu0 0
    %740 = vperm.xlu0 %739, %v522
    %v741 = vpop.permute.xlu0 %740
    %744 = vset.pattern.permute.xlu0 0
    %745 = vperm.xlu0 %744, %v537
    %v746 = vpop.permute.xlu0 %745
    %749 = vset.pattern.permute.xlu0 0
    %750 = vperm.xlu0 %749, %v552
    %v751 = vpop.permute.xlu0 %750
    %754 = vset.pattern.permute.xlu0 0
    %755 = vperm.xlu0 %754, %v567
    %v756 = vpop.permute.xlu0 %755
    %759 = vset.pattern.permute.xlu0 0
    %760 = vperm.xlu0 %759, %v582
    %v761 = vpop.permute.xlu0 %760
    %764 = vset.pattern.permute.xlu0 0
    %765 = vperm.xlu0 %764, %v597
    %v766 = vpop.permute.xlu0 %765
    %769 = vset.pattern.permute.xlu0 0
    %770 = vperm.xlu0 %769, %v612
    %v771 = vpop.permute.xlu0 %770
    %774 = vset.pattern.permute.xlu0 0
    %775 = vperm.xlu0 %774, %v627
    %v776 = vpop.permute.xlu0 %775
    %779 = vset.pattern.permute.xlu0 0
    %780 = vperm.xlu0 %779, %v642
    %v781 = vpop.permute.xlu0 %780
    %784 = vset.pattern.permute.xlu0 0
    %785 = vperm.xlu0 %784, %v657
    %v786 = vpop.permute.xlu0 %785
    %789 = vset.pattern.permute.xlu0 0
    %790 = vperm.xlu0 %789, %v672
    %v791 = vpop.permute.xlu0 %790
    %794 = vset.pattern.permute.xlu0 0
    %795 = vperm.xlu0 %794, %v687
    %v796 = vpop.permute.xlu0 %795
    %799 = vset.pattern.permute.xlu0 0
    %800 = vperm.xlu0 %799, %v702
    %v801 = vpop.permute.xlu0 %800
    %804 = vset.pattern.permute.xlu0 0
    %805 = vperm.xlu0 %804, %v717
    %v806 = vpop.permute.xlu0 %805
    %809 = vset.pattern.permute.xlu0 0
    %810 = vperm.xlu0 %809, %v732
    %v811 = vpop.permute.xlu0 %810
    %v813 = vmul.f32 %v42, %v736
    %v814 = vmul.f32 %v43, %v741
    %v815 = vmul.f32 %v44, %v746
    %v816 = vmul.f32 %v45, %v751
    %v817 = vmul.f32 %v46, %v756
    %v818 = vmul.f32 %v47, %v761
    %v819 = vmul.f32 %v48, %v766
    %v820 = vmul.f32 %v49, %v771
    %v821 = vmul.f32 %v50, %v776
    %v822 = vmul.f32 %v51, %v781
    %v823 = vmul.f32 %v52, %v786
    %v824 = vmul.f32 %v53, %v791
    %v825 = vmul.f32 %v54, %v796
    %v826 = vmul.f32 %v55, %v801
    %v827 = vmul.f32 %v56, %v806
    %v828 = vmul.f32 %v57, %v811
    %v829 = vrot.slane %v813, 4
    %v830 = vadd.f32 %v813, %v829
    %v831 = vrot.slane %v830, 2
    %v832 = vadd.f32 %v830, %v831
    %v833 = vrot.slane %v832, 1
    %v834 = vadd.f32 %v832, %v833
    %v835 = vrot.slane %v814, 4
    %v836 = vadd.f32 %v814, %v835
    %v837 = vrot.slane %v836, 2
    %v838 = vadd.f32 %v836, %v837
    %v839 = vrot.slane %v838, 1
    %v840 = vadd.f32 %v838, %v839
    %v841 = vrot.slane %v815, 4
    %v842 = vadd.f32 %v815, %v841
    %v843 = vrot.slane %v842, 2
    %v844 = vadd.f32 %v842, %v843
    %v845 = vrot.slane %v844, 1
    %v846 = vadd.f32 %v844, %v845
    %v847 = vrot.slane %v816, 4
    %v848 = vadd.f32 %v816, %v847
    %v849 = vrot.slane %v848, 2
    %v850 = vadd.f32 %v848, %v849
    %v851 = vrot.slane %v850, 1
    %v852 = vadd.f32 %v850, %v851
    %v853 = vrot.slane %v817, 4
    %v854 = vadd.f32 %v817, %v853
    %v855 = vrot.slane %v854, 2
    %v856 = vadd.f32 %v854, %v855
    %v857 = vrot.slane %v856, 1
    %v858 = vadd.f32 %v856, %v857
    %v859 = vrot.slane %v818, 4
    %v860 = vadd.f32 %v818, %v859
    %v861 = vrot.slane %v860, 2
    %v862 = vadd.f32 %v860, %v861
    %v863 = vrot.slane %v862, 1
    %v864 = vadd.f32 %v862, %v863
    %v865 = vrot.slane %v819, 4
    %v866 = vadd.f32 %v819, %v865
    %v867 = vrot.slane %v866, 2
    %v868 = vadd.f32 %v866, %v867
    %v869 = vrot.slane %v868, 1
    %v870 = vadd.f32 %v868, %v869
    %v871 = vrot.slane %v820, 4
    %v872 = vadd.f32 %v820, %v871
    %v873 = vrot.slane %v872, 2
    %v874 = vadd.f32 %v872, %v873
    %v875 = vrot.slane %v874, 1
    %v876 = vadd.f32 %v874, %v875
    %v877 = vrot.slane %v821, 4
    %v878 = vadd.f32 %v821, %v877
    %v879 = vrot.slane %v878, 2
    %v880 = vadd.f32 %v878, %v879
    %v881 = vrot.slane %v880, 1
    %v882 = vadd.f32 %v880, %v881
    %v883 = vrot.slane %v822, 4
    %v884 = vadd.f32 %v822, %v883
    %v885 = vrot.slane %v884, 2
    %v886 = vadd.f32 %v884, %v885
    %v887 = vrot.slane %v886, 1
    %v888 = vadd.f32 %v886, %v887
    %v889 = vrot.slane %v823, 4
    %v890 = vadd.f32 %v823, %v889
    %v891 = vrot.slane %v890, 2
    %v892 = vadd.f32 %v890, %v891
    %v893 = vrot.slane %v892, 1
    %v894 = vadd.f32 %v892, %v893
    %v895 = vrot.slane %v824, 4
    %v896 = vadd.f32 %v824, %v895
    %v897 = vrot.slane %v896, 2
    %v898 = vadd.f32 %v896, %v897
    %v899 = vrot.slane %v898, 1
    %v900 = vadd.f32 %v898, %v899
    %v901 = vrot.slane %v825, 4
    %v902 = vadd.f32 %v825, %v901
    %v903 = vrot.slane %v902, 2
    %v904 = vadd.f32 %v902, %v903
    %v905 = vrot.slane %v904, 1
    %v906 = vadd.f32 %v904, %v905
    %v907 = vrot.slane %v826, 4
    %v908 = vadd.f32 %v826, %v907
    %v909 = vrot.slane %v908, 2
    %v910 = vadd.f32 %v908, %v909
    %v911 = vrot.slane %v910, 1
    %v912 = vadd.f32 %v910, %v911
    %v913 = vrot.slane %v827, 4
    %v914 = vadd.f32 %v827, %v913
    %v915 = vrot.slane %v914, 2
    %v916 = vadd.f32 %v914, %v915
    %v917 = vrot.slane %v916, 1
    %v918 = vadd.f32 %v916, %v917
    %v919 = vrot.slane %v828, 4
    %v920 = vadd.f32 %v828, %v919
    %v921 = vrot.slane %v920, 2
    %v922 = vadd.f32 %v920, %v921
    %v923 = vrot.slane %v922, 1
    %v924 = vadd.f32 %v922, %v923
    %v925 = vld [vmem:[%s4] sm:$0xff]
    %v926 = vld [vmem:[%s4 + $0x8] sm:$0xff]
    %v927 = vld [vmem:[%s4 + $0x10] sm:$0xff]
    %v928 = vld [vmem:[%s4 + $0x18] sm:$0xff]
    %v929 = vld [vmem:[%s4 + $0x20] sm:$0xff]
    %v930 = vld [vmem:[%s4 + $0x28] sm:$0xff]
    %v931 = vld [vmem:[%s4 + $0x30] sm:$0xff]
    %v932 = vld [vmem:[%s4 + $0x38] sm:$0xff]
    %v933 = vld [vmem:[%s4 + $0x40] sm:$0xff]
    %v934 = vld [vmem:[%s4 + $0x48] sm:$0xff]
    %v935 = vld [vmem:[%s4 + $0x50] sm:$0xff]
    %v936 = vld [vmem:[%s4 + $0x58] sm:$0xff]
    %v937 = vld [vmem:[%s4 + $0x60] sm:$0xff]
    %v938 = vld [vmem:[%s4 + $0x68] sm:$0xff]
    %v939 = vld [vmem:[%s4 + $0x70] sm:$0xff]
    %v940 = vld [vmem:[%s4 + $0x78] sm:$0xff]
    %v941 = vld [vmem:[%s5] sm:$0x1]
    %v943 = vperm.slane %v941, 0
    %v961 = vsel %vm245, %v840, %v834
    %v962 = vsel %vm247, %v846, %v961
    %v963 = vsel %vm249, %v852, %v962
    %v964 = vsel %vm251, %v858, %v963
    %v965 = vsel %vm253, %v864, %v964
    %v966 = vsel %vm255, %v870, %v965
    %v967 = vsel %vm257, %v876, %v966
    %v968 = vsel %vm245, %v888, %v882
    %v969 = vsel %vm247, %v894, %v968
    %v970 = vsel %vm249, %v900, %v969
    %v971 = vsel %vm251, %v906, %v970
    %v972 = vsel %vm253, %v912, %v971
    %v973 = vsel %vm255, %v918, %v972
    %v974 = vsel %vm257, %v924, %v973
    %977 = vmatpush.msra.mxu0 %v940
    %978 = vmatpush.msra.mxu0 %v939
    %979 = vmatpush.msra.mxu0 %v938
    %980 = vmatpush.msra.mxu0 %v937
    %981 = vmatpush.msra.mxu0 %v936
    %982 = vmatpush.msra.mxu0 %v935
    %983 = vmatpush.msra.mxu0 %v934
    %984 = vmatpush.msra.mxu0 %v933
    %985 = vmatpush.msra.mxu0 %v932
    %986 = vmatpush.msra.mxu0 %v931
    %987 = vmatpush.msra.mxu0 %v930
    %988 = vmatpush.msra.mxu0 %v929
    %989 = vmatpush.msra.mxu0 %v928
    %990 = vmatpush.msra.mxu0 %v927
    %991 = vmatpush.msra.mxu0 %v926
    %992 = vmatpush.msra.mxu0 %v925
    %993 = vmatmul.f32.gmra.mxu0 %v967
    %v994 = vpop.f32.mrf.mxu0
    %v995 = vadd.f32 %v943, %v994
    %996 = vmatmul.f32.gmra.mxu0 %v974
    %v997 = vpop.f32.mrf.mxu0
    %v998 = vadd.f32 %v943, %v997
    %999 = vdwg.mxu0
    %v1000 = vperm.slane %v736, %v228
    %v1001 = vperm.slane %v741, %v228
    %v1002 = vperm.slane %v746, %v228
    %v1003 = vperm.slane %v751, %v228
    %v1004 = vperm.slane %v756, %v228
    %v1005 = vperm.slane %v761, %v228
    %v1006 = vperm.slane %v766, %v228
    %v1007 = vperm.slane %v771, %v228
    %v1008 = vperm.slane %v776, %v228
    %v1009 = vperm.slane %v781, %v228
    %v1010 = vperm.slane %v786, %v228
    %v1011 = vperm.slane %v791, %v228
    %v1012 = vperm.slane %v796, %v228
    %v1013 = vperm.slane %v801, %v228
    %v1014 = vperm.slane %v806, %v228
    %v1015 = vperm.slane %v811, %v228
    %v1016 = vsel %vm245, %v1001, %v1000
    %v1017 = vsel %vm247, %v1002, %v1016
    %v1018 = vsel %vm249, %v1003, %v1017
    %v1019 = vsel %vm251, %v1004, %v1018
    %v1020 = vsel %vm253, %v1005, %v1019
    %v1021 = vsel %vm255, %v1006, %v1020
    %v1022 = vsel %vm257, %v1007, %v1021
    %v1023 = vsel %vm245, %v1009, %v1008
    %v1024 = vsel %vm247, %v1010, %v1023
    %v1025 = vsel %vm249, %v1011, %v1024
    %v1026 = vsel %vm251, %v1012, %v1025
    %v1027 = vsel %vm253, %v1013, %v1026
    %v1028 = vsel %vm255, %v1014, %v1027
    %v1029 = vsel %vm257, %v1015, %v1028
    %1032 = vxpose.xlu0.b32.start [1/16] %v1022, 128
    %1033 = vxpose.xlu0.b32.cont [2/16] %v1029, 128
    %1034 = vxpose.xlu0.b32.cont [3/16] 0.0, 128
    %1035 = vxpose.xlu0.b32.cont [4/16] 0.0, 128
    %1036 = vxpose.xlu0.b32.cont [5/16] 0.0, 128
    %1037 = vxpose.xlu0.b32.cont [6/16] 0.0, 128
    %1038 = vxpose.xlu0.b32.cont [7/16] 0.0, 128
    %1039 = vxpose.xlu0.b32.cont [8/16] 0.0, 128
    %1040 = vxpose.xlu0.b32.cont [9/16] 0.0, 128
    %1041 = vxpose.xlu0.b32.cont [10/16] 0.0, 128
    %1042 = vxpose.xlu0.b32.cont [11/16] 0.0, 128
    %1043 = vxpose.xlu0.b32.cont [12/16] 0.0, 128
    %1044 = vxpose.xlu0.b32.cont [13/16] 0.0, 128
    %1045 = vxpose.xlu0.b32.cont [14/16] 0.0, 128
    %1046 = vxpose.xlu0.b32.cont [15/16] 0.0, 128
    %1047 = vxpose.xlu0.b32.end [16/16] 0.0, 128
    %v1048 = vpop.trf.xlu0
    %v1049 = vpop.trf.xlu0
    %v1050 = vpop.trf.xlu0
    %v1051 = vpop.trf.xlu0
    %v1052 = vpop.trf.xlu0
    %v1053 = vpop.trf.xlu0
    %v1054 = vpop.trf.xlu0
    %v1055 = vpop.trf.xlu0
    %v1056 = vpop.trf.xlu0
    %v1057 = vpop.trf.xlu0
    %v1058 = vpop.trf.xlu0
    %v1059 = vpop.trf.xlu0
    %v1060 = vpop.trf.xlu0
    %v1061 = vpop.trf.xlu0
    %v1062 = vpop.trf.xlu0
    %v1063 = vpop.trf.xlu0
    %vm1064 = vcmask 130048
    %1065 = vst.msk [vmem:[#allocation5] sm:$0xff] %vm1064, %v1048
    %1066 = vxpose.xlu0.b32.start [1/16] %v995, 128
    %1067 = vxpose.xlu0.b32.cont [2/16] %v998, 128
    %1068 = vxpose.xlu0.b32.cont [3/16] 0.0, 128
    %1069 = vxpose.xlu0.b32.cont [4/16] 0.0, 128
    %1070 = vxpose.xlu0.b32.cont [5/16] 0.0, 128
    %1071 = vxpose.xlu0.b32.cont [6/16] 0.0, 128
    %1072 = vxpose.xlu0.b32.cont [7/16] 0.0, 128
    %1073 = vxpose.xlu0.b32.cont [8/16] 0.0, 128
    %1074 = vxpose.xlu0.b32.cont [9/16] 0.0, 128
    %1075 = vxpose.xlu0.b32.cont [10/16] 0.0, 128
    %1076 = vxpose.xlu0.b32.cont [11/16] 0.0, 128
    %1077 = vxpose.xlu0.b32.cont [12/16] 0.0, 128
    %1078 = vxpose.xlu0.b32.cont [13/16] 0.0, 128
    %1079 = vxpose.xlu0.b32.cont [14/16] 0.0, 128
    %1080 = vxpose.xlu0.b32.cont [15/16] 0.0, 128
    %1081 = vxpose.xlu0.b32.end [16/16] 0.0, 128
    %v1082 = vpop.trf.xlu0
    %v1083 = vpop.trf.xlu0
    %v1084 = vpop.trf.xlu0
    %v1085 = vpop.trf.xlu0
    %v1086 = vpop.trf.xlu0
    %v1087 = vpop.trf.xlu0
    %v1088 = vpop.trf.xlu0
    %v1089 = vpop.trf.xlu0
    %v1090 = vpop.trf.xlu0
    %v1091 = vpop.trf.xlu0
    %v1092 = vpop.trf.xlu0
    %v1093 = vpop.trf.xlu0
    %v1094 = vpop.trf.xlu0
    %v1095 = vpop.trf.xlu0
    %v1096 = vpop.trf.xlu0
    %v1097 = vpop.trf.xlu0
    %1098 = vst.msk [vmem:[%s6] sm:$0xff] %vm1064, %v1082
    %1099 = vst.msk [vmem:[%s6 + $0x8] sm:$0xff] %vm1064, %v1083
    %1100 = vst.msk [vmem:[%s6 + $0x10] sm:$0xff] %vm1064, %v1084
    %1101 = vst.msk [vmem:[%s6 + $0x18] sm:$0xff] %vm1064, %v1085
    // Predicated region
    $region30: #{tpu_custom_call.1} parent=1 // pred_check
      _
    $region31: #{tpu_custom_call.1} parent=1 // pred_check_branch
      %1103 = sbr.rel (0) target = $region33
    $region32: #{tpu_custom_call.1} parent=1 // pred_region
      _
    $region33: #{tpu_custom_call.1} parent=1 // pred_fallthru
      _
    // Predicated region
    $region34: #{tpu_custom_call.1} parent=1 // pred_check
      _
    $region35: #{tpu_custom_call.1} parent=1 // pred_check_branch
      %1105 = sbr.rel (0) target = $region37
    $region36: #{tpu_custom_call.1} parent=1 // pred_region
      %1107 = vsyncadd [#allocation4], 0
      %s1109 = sshll.u32 [#allocation5], 4
      %s1110 = int_to_ptr.vmem [resolvable:$true] %s1109
      %s1111 = sshll.u32 %s7, 4
      %s1112 = int_to_ptr.hbm [resolvable:$true] %s1111
      %1114 = dma.vmem_to_hbm [thread:$0]  %s1110, 128, %s1112, [#allocation4]
    $region37: #{tpu_custom_call.1} parent=1 // pred_fallthru
      _
    // Predicated region
    $region38: #{tpu_custom_call.1} parent=1 // pred_check
      _
    $region39: #{tpu_custom_call.1} parent=1 // pred_check_branch
      %1116 = sbr.rel (0) target = $region41
    $region40: #{tpu_custom_call.1} parent=1 // pred_region
      _
    $region41: #{tpu_custom_call.1} parent=1 // pred_fallthru
      _
    // Predicated region
    $region42: #{tpu_custom_call.1} parent=1 // pred_check
      _
    $region43: #{tpu_custom_call.1} parent=1 // pred_check_branch
      %1118 = sbr.rel (0) target = $region45
    $region44: #{tpu_custom_call.1} parent=1 // pred_region
      %1120 = dma.done [#allocation4], 128
    $region45: #{tpu_custom_call.1} parent=1 // pred_fallthru
      _
    %1121 = vsyncpa [#allocation3], 1
    %1122 = vsyncpa [#allocation4], 1

</llo_original>
